<compile_context>
chip_gen: v5e
topology: v5e:2x2
jax: 0.10.0
libtpu: 0.0.40
codegen_flags: <defaults>
</compile_context>

<pallas_src>
import functools

import jax
import jax.numpy as jnp
from jax.experimental import pallas as pl
from jax.experimental.pallas import tpu as pltpu


def _round_up(x: int, m: int) -> int:
    return ((x + m - 1) // m) * m


# ----------------------------- kernels --------------------------------------


def _linear_kernel_single(x_ref, w_ref, b_ref, o_ref):
    # Single K step: no scratch accumulator, no init/finalize branches.
    # dropout(p=0.0) is identity; activation=None -> pure affine output.
    # TODO(synk): dropout_rate > 0.0 (training mask via pltpu.prng_*) and a
    # non-None activation callable would be applied here.
    o_ref[...] = (
        jnp.dot(x_ref[...], w_ref[...], preferred_element_type=jnp.float32)
        + b_ref[...].astype(jnp.float32)
    ).astype(o_ref.dtype)


def _linear_kernel_ksplit(x_ref, w_ref, b_ref, o_ref, acc_ref):
    # Grid = (batch tiles "parallel", K tiles "arbitrary"); f32 accumulator.
    k = pl.program_id(1)

    @pl.when(k == 0)
    def _init():
        acc_ref[...] = jnp.zeros_like(acc_ref)

    acc_ref[...] += jnp.dot(x_ref[...], w_ref[...], preferred_element_type=jnp.float32)

    @pl.when(k == pl.num_programs(1) - 1)
    def _finalize():
        o_ref[...] = (acc_ref[...] + b_ref[...].astype(jnp.float32)).astype(o_ref.dtype)


# ------------------------- one-time parameter prep --------------------------


def prepare_params(weight, bias, *, param_dtype=None, block_k=512):
    """One-time prep (NOT in the per-call path).

    Takes nn.Linear-layout weight (Out, In) and bias (Out,), returns:
      w_t_pad: (InPad, OutPad) transposed, OutPad % 128 == 0 (lane-dense stores),
               In zero-padded to a block_k multiple only when In > block_k so the
               forward can split K cleanly; stored in `param_dtype` if given
               (e.g. jnp.bfloat16 -> no in-kernel casts, half the DMA bytes).
      b_pad:   (1, OutPad)
      out_size: original Out (for slicing the padded kernel output).
    """
    out_size, in_size = weight.shape
    dt = jnp.dtype(param_dtype) if param_dtype is not None else weight.dtype
    out_pad = _round_up(out_size, 128)
    in_pad = _round_up(in_size, block_k) if in_size > block_k else in_size
    w_t_pad = (
        jnp.zeros((in_pad, out_pad), dt).at[:in_size, :out_size].set(weight.T.astype(dt))
    )
    b_pad = jnp.zeros((1, out_pad), dt).at[:, :out_size].set(bias.astype(dt))
    return w_t_pad, b_pad, out_size


# ------------------------------- forward ------------------------------------


@functools.partial(
    jax.jit,
    static_argnames=("out_size", "compute_dtype", "block_m", "block_k", "force_pallas"),
)
def text_classifier_forward(x, w_t_pad, b_pad, out_size, *,
                            compute_dtype=None, block_m=512, block_k=512,
                            force_pallas=False):
    """x: (B, In). w_t_pad/b_pad come from prepare_params. Returns (B, out_size)."""
    B, In = x.shape
    InPad, OutPad = w_t_pad.shape
    out_dtype = x.dtype  # keep nn.Linear output-dtype parity even if operands are bf16

    # Tiny-shape fast path: one grid step of pure fixed overhead plus Out->128
    # padding waste; XLA's dot wins there.
    if not force_pallas and B * In * OutPad < (1 << 20):
        y = jnp.dot(x, w_t_pad[:In]) + b_pad[0]
        return y[:, :out_size].astype(out_dtype)

    # Operand cast happens in the wrapper (once), not per K step in the kernel.
    if compute_dtype is not None and x.dtype != jnp.dtype(compute_dtype):
        x = x.astype(compute_dtype)

    sub = 16 if jnp.dtype(x.dtype).itemsize == 2 else 8  # bf16 packs 16 sublanes

    # Batch tile.
    TM = min(_round_up(B, sub), block_m)
    # Megacore / dual-TC (v7x): ensure >= 2 batch tiles when the batch allows it.
    if B >= 2 * sub and _round_up(B, TM) == TM:
        TM = _round_up((B + 1) // 2, sub)
    Bp = _round_up(B, TM)

    # K tile: split only when prepare_params padded In to a block_k multiple.
    if InPad > block_k and InPad % block_k == 0:
        TK = block_k
    else:
        TK = InPad  # full contraction dim as one block (full-dim exemption)

    sz_x = jnp.dtype(x.dtype).itemsize
    sz_w = jnp.dtype(w_t_pad.dtype).itemsize
    sz_o = jnp.dtype(out_dtype).itemsize

    def footprint(tm, tk):
        # Double-buffered inputs/outputs + (if K split) the f32 accumulator.
        fp = 2 * tm * tk * sz_x + 2 * tk * OutPad * sz_w + 2 * OutPad * sz_w
        fp += 2 * tm * OutPad * sz_o
        if InPad // tk > 1:
            fp += tm * OutPad * 4
        return fp

    VMEM_BUDGET = 40 << 20  # conservative: leaves headroom on v7x's 64 MiB/TC
    while footprint(TM, TK) > VMEM_BUDGET and TM > sub:
        TM = max(sub, _round_up(TM // 2, sub))
        Bp = _round_up(B, TM)
    while footprint(TM, TK) > VMEM_BUDGET and TK > 128 and TK % 256 == 0:
        TK //= 2  # halving preserves divisibility of InPad and the 128 multiple

    if Bp != B or InPad != In:
        xp = jnp.zeros((Bp, InPad), x.dtype).at[:B, :In].set(x)
    else:
        xp = x

    n_i = Bp // TM
    n_k = InPad // TK

    # Honest cost estimate: weight is re-streamed per batch tile only when K split.
    weight_streams = n_i if n_k > 1 else 1
    cost = pl.CostEstimate(
        flops=2 * Bp * InPad * OutPad,
        transcendentals=0,
        bytes_accessed=(Bp * InPad * sz_x
                        + weight_streams * InPad * OutPad * sz_w
                        + OutPad * sz_w
                        + Bp * OutPad * sz_o),
    )

    fp = footprint(TM, TK)
    vmem_limit = None
    if fp > (28 << 20):  # only raise above the 32 MiB default scoped limit if needed
        vmem_limit = min(_round_up(fp + (8 << 20), 1 << 20), 96 << 20)

    if n_k == 1:
        out_padded = pl.pallas_call(
            _linear_kernel_single,
            out_shape=jax.ShapeDtypeStruct((Bp, OutPad), out_dtype),
            grid_spec=pltpu.PrefetchScalarGridSpec(
                num_scalar_prefetch=0,
                grid=(n_i,),
                in_specs=[
                    pl.BlockSpec((TM, TK), lambda i: (i, 0)),       # x tile
                    pl.BlockSpec((TK, OutPad), lambda i: (0, 0)),   # resident weight
                    pl.BlockSpec((1, OutPad), lambda i: (0, 0)),    # resident bias
                ],
                out_specs=pl.BlockSpec((TM, OutPad), lambda i: (i, 0)),
            ),
            compiler_params=pltpu.CompilerParams(
                dimension_semantics=("parallel",),
                vmem_limit_bytes=vmem_limit,
            ),
            cost_estimate=cost,
        )(xp, w_t_pad, b_pad)
    else:
        out_padded = pl.pallas_call(
            _linear_kernel_ksplit,
            out_shape=jax.ShapeDtypeStruct((Bp, OutPad), out_dtype),
            grid_spec=pltpu.PrefetchScalarGridSpec(
                num_scalar_prefetch=0,
                grid=(n_i, n_k),
                in_specs=[
                    pl.BlockSpec((TM, TK), lambda i, k: (i, k)),       # x tile
                    pl.BlockSpec((TK, OutPad), lambda i, k: (k, 0)),   # weight tile
                    pl.BlockSpec((1, OutPad), lambda i, k: (0, 0)),    # bias
                ],
                out_specs=pl.BlockSpec((TM, OutPad), lambda i, k: (i, 0)),
                scratch_shapes=[pltpu.VMEM((TM, OutPad), jnp.float32)],
            ),
            compiler_params=pltpu.CompilerParams(
                dimension_semantics=("parallel", "arbitrary"),
                vmem_limit_bytes=vmem_limit,
            ),
            cost_estimate=cost,
        )(xp, w_t_pad, b_pad)

    return out_padded[:B, :out_size]


def _reference(x, weight, bias):
    return x @ weight.T + bias


if __name__ == "__main__":
    key = jax.random.PRNGKey(0)
    k_x, k_w, k_b = jax.random.split(key, 3)

    batch = 8
    input_size = 32
    output_size = 16

    x = jax.random.normal(k_x, (batch, input_size), dtype=jnp.float32)

    # Deterministic parameter init mimicking nn.Linear: U(-1/sqrt(in), 1/sqrt(in))
    bound = 1.0 / (input_size ** 0.5)
    weight = jax.random.uniform(
        k_w, (output_size, input_size), minval=-bound, maxval=bound, dtype=jnp.float32
    )
    bias = jax.random.uniform(
        k_b, (output_size,), minval=-bound, maxval=bound, dtype=jnp.float32
    )

    ref = _reference(x, weight, bias)

    # --- f32 path (exact nn.Linear parity), Pallas kernel forced on ---
    w_f32, b_f32, out_size = prepare_params(weight, bias)
    out = text_classifier_forward(x, w_f32, b_f32, out_size, force_pallas=True)
    out = jax.block_until_ready(out)
    assert out.shape == (batch, output_size)
    assert out.dtype == jnp.float32
    assert jnp.allclose(out, ref, atol=1e-5, rtol=1e-5)

    # --- bf16-operand path: params stored bf16 at prep time, x pre-cast in wrapper,
    #     f32 accumulation (recommended at large shapes on v6e/v7x) ---
    w_bf16, b_bf16, _ = prepare_params(weight, bias, param_dtype=jnp.bfloat16)
    out_bf16 = text_classifier_forward(
        x, w_bf16, b_bf16, out_size, compute_dtype=jnp.bfloat16, force_pallas=True
    )
    out_bf16 = jax.block_until_ready(out_bf16)
    assert out_bf16.shape == (batch, output_size)
    assert jnp.allclose(out_bf16, ref, atol=5e-2, rtol=5e-2)

    # --- default (small-shape fallback) path still matches ---
    out_small = jax.block_until_ready(
        text_classifier_forward(x, w_f32, b_f32, out_size)
    )
    assert jnp.allclose(out_small, ref, atol=1e-5, rtol=1e-5)

    print("KERNEL_OK")
</pallas_src>

<mosaic_0001>
module attributes {stable_mosaic.version = 11 : i64} {
  func.func @_linear_kernel_single(%arg0: i32, %arg1: memref<8x32xf32, #tpu.memory_space<vmem>>, %arg2: memref<32x128xf32, #tpu.memory_space<vmem>>, %arg3: memref<1x128xf32, #tpu.memory_space<vmem>>, %arg4: memref<8x128xf32, #tpu.memory_space<vmem>>) attributes {dimension_semantics = [#tpu.dimension_semantics<parallel>], iteration_bounds = array<i64: 1>, scalar_prefetch = 0 : i64, scratch_operands = 0 : i64, tpu.core_type = #tpu.core_type<tc>, window_params = [{transform_indices = @transform_0, window_bounds = array<i64: 8, 32>}, {pipeline_mode = #tpu.pipeline_mode<synchronous>, transform_indices = @transform_1, window_bounds = array<i64: 32, 128>}, {pipeline_mode = #tpu.pipeline_mode<synchronous>, transform_indices = @transform_2, window_bounds = array<i64: 1, 128>}, {transform_indices = @transform_3, window_bounds = array<i64: 8, 128>}]} {
    %c0 = arith.constant 0 : index
    %c0_0 = arith.constant 0 : index
    %0 = vector.load %arg1[%c0, %c0_0] : memref<8x32xf32, #tpu.memory_space<vmem>>, vector<8x32xf32>
    %c0_1 = arith.constant 0 : index
    %c0_2 = arith.constant 0 : index
    %1 = vector.load %arg2[%c0_1, %c0_2] : memref<32x128xf32, #tpu.memory_space<vmem>>, vector<32x128xf32>
    %cst = arith.constant dense<0.000000e+00> : vector<8x128xf32>
    %2 = tpu.matmul %0, %1, %cst {dimension_numbers = #tpu.dot_dimension_numbers<[1], [0], [0], [1], [0, 0, 1, 1], [], []>} : vector<8x32xf32>, vector<32x128xf32>, vector<8x128xf32> -> vector<8x128xf32>
    %c0_3 = arith.constant 0 : index
    %c0_4 = arith.constant 0 : index
    %3 = vector.load %arg3[%c0_3, %c0_4] : memref<1x128xf32, #tpu.memory_space<vmem>>, vector<1x128xf32>
    %4 = vector.broadcast %3 : vector<1x128xf32> to vector<8x128xf32>
    %5 = arith.addf %2, %4 : vector<8x128xf32>
    %c0_5 = arith.constant 0 : index
    %c0_6 = arith.constant 0 : index
    %6 = vector.load %arg4[%c0_5, %c0_6] : memref<8x128xf32, #tpu.memory_space<vmem>>, vector<8x128xf32>
    tpu.vector_store %arg4[%c0_5, %c0_6], %5 {strides = array<i32>} : memref<8x128xf32, #tpu.memory_space<vmem>>, vector<8x128xf32>,
    return
  }
  func.func @transform_0(%arg0: i32) -> (i32, i32) {
    %c0_i32 = arith.constant 0 : i32
    %c0_i32_0 = arith.constant 0 : i32
    return %arg0, %c0_i32 : i32, i32
  }
  func.func @transform_1(%arg0: i32) -> (i32, i32) {
    %c0_i32 = arith.constant 0 : i32
    %c0_i32_0 = arith.constant 0 : i32
    %c0_i32_1 = arith.constant 0 : i32
    return %c0_i32, %c0_i32_0 : i32, i32
  }
  func.func @transform_2(%arg0: i32) -> (i32, i32) {
    %c0_i32 = arith.constant 0 : i32
    %c0_i32_0 = arith.constant 0 : i32
    %c0_i32_1 = arith.constant 0 : i32
    return %c0_i32, %c0_i32_0 : i32, i32
  }
  func.func @transform_3(%arg0: i32) -> (i32, i32) {
    %c0_i32 = arith.constant 0 : i32
    %c0_i32_0 = arith.constant 0 : i32
    return %arg0, %c0_i32 : i32, i32
  }
}

</mosaic_0001>

<llo_original>
// kernel: text_classifier_forward.1
$region0: #{text_classifier_forward.1}
  #allocation0 [shape = 'u32[]', space=smem, size = 0x4, offset = 0x4, fixed_abs, tag = 'smem constant byte address 0x4 - core index']
  #allocation1 [shape = 'u32[72,128]{1,0:T(1,128)}', space=vmem, size = 0x9000, scoped, tag = 'internal scratch']
  %s0 = inlined_call_operand.hbm [shape: f32[8,32], index: 0, kind: input, shape index: {}]
  %s1 = inlined_call_operand.hbm [shape: f32[32,128], index: 1, kind: input, shape index: {}]
  %s2 = inlined_call_operand.vmem [shape: f32[1,128], index: 2, kind: input, shape index: {}]
  %s3 = inlined_call_operand.hbm [shape: f32[8,128], index: 3, kind: output, shape index: {}]
  %s4 = sld [smem:[#allocation0]]
  $region30: #{text_classifier_forward.1} parent=0
    _
  %s6 = ssub.s32 1, %s4
  %s7 = scalar_select 0, %s6, %s4
  $region1: #{text_classifier_forward.1} parent=0
    #allocation2 [shape = 'u8[4096]{0}', space=vmem, size = 0x1000, scoped, tag = 'input window, operand 0, single buffered']
    #allocation3 [shape = 's32[1]{0}', space=sflag, size = 0x4, scoped, tag = 'scoped memory for text_classifier_forward.1']
    #allocation4 [shape = 's32[1]{0}', space=sflag, size = 0x4, scoped, tag = 'scoped memory for text_classifier_forward.1']
    #allocation5 [shape = 'u8[16384]{0}', space=vmem, size = 0x4000, scoped, tag = 'input window, operand 1, single buffered']
    #allocation6 [shape = 's32[1]{0}', space=sflag, size = 0x4, scoped, tag = 'scoped memory for text_classifier_forward.1']
    #allocation7 [shape = 'u8[4096]{0}', space=vmem, size = 0x1000, scoped, tag = 'output window, operand 0, single buffered']
    %8 = vsyncpa [#allocation3], 0
    %9 = vsyncpa [#allocation6], 0
    %10 = vsyncpa [#allocation4], 0
    // Predicated region
    $region2: #{text_classifier_forward.1} parent=1 // pred_check
      _
    $region3: #{text_classifier_forward.1} parent=1 // pred_check_branch
      %12 = sbr.rel (0) target = $region5
    $region4: #{text_classifier_forward.1} parent=1 // pred_region
      %14 = vsyncadd [#allocation3], 0
      %s16 = sshll.u32 %s0, 4
      %s17 = int_to_ptr.hbm [resolvable:$true] %s16
      %s18 = sshll.u32 [#allocation2], 4
      %s19 = int_to_ptr.vmem [resolvable:$true] %s18
      %21 = dma.hbm_to_vmem [thread:$0]  %s17, 128, %s19, [#allocation3]
    $region5: #{text_classifier_forward.1} parent=1 // pred_fallthru
      _
    // Predicated region
    $region6: #{text_classifier_forward.1} parent=1 // pred_check
      _
    $region7: #{text_classifier_forward.1} parent=1 // pred_check_branch
      %23 = sbr.rel (0) target = $region9
    $region8: #{text_classifier_forward.1} parent=1 // pred_region
      %25 = vsyncadd [#allocation6], 0
      %s26 = sshll.u32 %s1, 4
      %s27 = int_to_ptr.hbm [resolvable:$true] %s26
      %s28 = sshll.u32 [#allocation5], 4
      %s29 = int_to_ptr.vmem [resolvable:$true] %s28
      %34 = dma.hbm_to_vmem [thread:$0]  %s27, 512, %s29, [#allocation6], 128, 128, 8
    $region9: #{text_classifier_forward.1} parent=1 // pred_fallthru
      _
    // Predicated region
    $region10: #{text_classifier_forward.1} parent=1 // pred_check
      _
    $region11: #{text_classifier_forward.1} parent=1 // pred_check_branch
      %36 = sbr.rel (0) target = $region13
    $region12: #{text_classifier_forward.1} parent=1 // pred_region
      _
    $region13: #{text_classifier_forward.1} parent=1 // pred_fallthru
      _
    // Predicated region
    $region14: #{text_classifier_forward.1} parent=1 // pred_check
      _
    $region15: #{text_classifier_forward.1} parent=1 // pred_check_branch
      %38 = sbr.rel (0) target = $region17
    $region16: #{text_classifier_forward.1} parent=1 // pred_region
      %40 = dma.done [#allocation3], 128
    $region17: #{text_classifier_forward.1} parent=1 // pred_fallthru
      _
    // Predicated region
    $region18: #{text_classifier_forward.1} parent=1 // pred_check
      _
    $region19: #{text_classifier_forward.1} parent=1 // pred_check_branch
      %42 = sbr.rel (0) target = $region21
    $region20: #{text_classifier_forward.1} parent=1 // pred_region
      %44 = dma.done [#allocation6], 512
    $region21: #{text_classifier_forward.1} parent=1 // pred_fallthru
      _
    %v45 = vld [vmem:[#allocation2] sm:$0xff]
    %v46 = vld [vmem:[#allocation5] sm:$0xff]
    %v47 = vld [vmem:[#allocation5 + $0x8] sm:$0xff]
    %v48 = vld [vmem:[#allocation5 + $0x10] sm:$0xff]
    %v49 = vld [vmem:[#allocation5 + $0x18] sm:$0xff]
    %v50 = vld [vmem:[%s2] sm:$0x1]
    %v52 = vperm.slane %v50, 0
    %vm54 = vcmask 261120
    %v56 = vsel %vm54, %v45, 0
    %58 = vmatpush.msra.mxu0 0.0
    %59 = vmatpush.msra.mxu0 0.0
    %60 = vmatpush.msra.mxu0 0.0
    %61 = vmatpush.msra.mxu0 0.0
    %62 = vmatpush.msra.mxu0 0.0
    %63 = vmatpush.msra.mxu0 0.0
    %64 = vmatpush.msra.mxu0 0.0
    %65 = vmatpush.msra.mxu0 0.0
    %66 = vmatpush.msra.mxu0 0.0
    %67 = vmatpush.msra.mxu0 0.0
    %68 = vmatpush.msra.mxu0 0.0
    %69 = vmatpush.msra.mxu0 0.0
    %70 = vmatpush.msra.mxu0 %v49
    %71 = vmatpush.msra.mxu0 %v48
    %72 = vmatpush.msra.mxu0 %v47
    %73 = vmatpush.msra.mxu0 %v46
    %74 = vmatmul.f32.gmra.mxu0 %v56
    %v75 = vpop.f32.mrf.mxu0
    %v76 = vadd.f32 %v52, %v75
    %77 = vdwg.mxu0
    %78 = vst [vmem:[#allocation7] sm:$0xff] %v76
    // Predicated region
    $region22: #{text_classifier_forward.1} parent=1 // pred_check
      _
    $region23: #{text_classifier_forward.1} parent=1 // pred_check_branch
      %80 = sbr.rel (0) target = $region25
    $region24: #{text_classifier_forward.1} parent=1 // pred_region
      %82 = vsyncadd [#allocation4], 0
      %s84 = sshll.u32 [#allocation7], 4
      %s85 = int_to_ptr.vmem [resolvable:$true] %s84
      %s86 = sshll.u32 %s3, 4
      %s87 = int_to_ptr.hbm [resolvable:$true] %s86
      %89 = dma.vmem_to_hbm [thread:$0]  %s85, 128, %s87, [#allocation4]
    $region25: #{text_classifier_forward.1} parent=1 // pred_fallthru
      _
    // Predicated region
    $region26: #{text_classifier_forward.1} parent=1 // pred_check
      _
    $region27: #{text_classifier_forward.1} parent=1 // pred_check_branch
      %91 = sbr.rel (0) target = $region29
    $region28: #{text_classifier_forward.1} parent=1 // pred_region
      %93 = dma.done [#allocation4], 128
    $region29: #{text_classifier_forward.1} parent=1 // pred_fallthru
      _
    %94 = vsyncpa [#allocation3], 1
    %95 = vsyncpa [#allocation6], 1
    %96 = vsyncpa [#allocation4], 1

</llo_original>
